<compile_context>
chip_gen: v6e
topology: v6e:2x2x1
jax: 0.10.0
libtpu: 0.0.40
codegen_flags: <defaults>
</compile_context>

<pallas_src>
import numpy as np
import jax
import jax.numpy as jnp
from jax import lax
from jax.experimental import pallas as pl
from jax.experimental.pallas import tpu as pltpu


def _ham_classifier_kernel(x_ref, sqinv_ref, u_ref, out_ref):
    B, S, E = x_ref.shape
    D2 = u_ref.shape[1]          # 2*D, u_ref = [U_re | U_im]
    D = D2 // 2
    eps = 1e-12

    x = x_ref[...]                                            # (B, S, E)

    # ---- state(): mean over *padded* seq (torch x.mean(dim=1)), zero-norm fix
    sent = jnp.sum(x, axis=1) * (1.0 / S)                     # (B, E)
    nrm2 = jnp.sum(sent * sent, axis=1, keepdims=True)        # (B, 1)
    col = lax.broadcasted_iota(jnp.int32, (B, E), 1)
    e0 = (col == 0).astype(jnp.float32)                       # |0> basis state
    sent = jnp.where(nrm2 <= 0.0, e0, sent)
    nrm2 = jnp.sum(sent * sent, axis=1, keepdims=True)
    # eps clamp (F.normalize-style) guards near-zero sentence means vs overflow
    sent = sent * lax.rsqrt(jnp.maximum(nrm2, eps * eps))

    # ---- circuit unitary: single fused (B,E)@(E,2D) MXU matmul -> [Re | Im] --
    s_cat = jnp.dot(sent, u_ref[...], preferred_element_type=jnp.float32)  # (B, 2D)
    sre3 = s_cat[:, :D].reshape(B, 1, D)                      # (B, 1, D)
    sim3 = s_cat[:, D:].reshape(B, 1, D)                      # (B, 1, D)

    # ---- hamiltonian(): fold 1/seq_len into x once, then one batched Gram ---
    xs = x * sqinv_ref[...]                                   # (B,S,E) * (B,1,1)
    g = jnp.einsum('bsi,bsj->bij', xs, xs,
                   preferred_element_type=jnp.float32)        # (B, E, E) == H

    # ---- F.normalize over batch dim: one rsqrt (couples all samples) --------
    sumsq = jnp.sum(g * g, axis=0, keepdims=True)             # (1, E, E)
    hn = g * lax.rsqrt(jnp.maximum(sumsq, eps * eps))         # (B, E, E)

    # ---- expval: Re(s H s^dagger) = sre·H·sre + sim·H·sim  (H real symmetric)
    # two batched matvecs, no (B,D,D) outer product, no scratch:
    t_re = jnp.einsum('bkj,bij->bki', sre3, hn,
                      preferred_element_type=jnp.float32)     # (B, 1, D)
    t_im = jnp.einsum('bkj,bij->bki', sim3, hn,
                      preferred_element_type=jnp.float32)     # (B, 1, D)
    q = jnp.sum(t_re * sre3 + t_im * sim3,
                axis=2, keepdims=True).reshape(B, 1)          # (B, 1)

    # numerically stable sigmoid
    z = jnp.exp(-jnp.abs(q))
    sig = jnp.where(q >= 0.0, 1.0 / (1.0 + z), z / (1.0 + z)) # (B, 1)

    # ---- single dense lane-aligned packed store: [Re | Im | ev | 0 ...] ------
    pack_w = out_ref.shape[1]
    tail = jnp.zeros((B, pack_w - D2 - 1), dtype=jnp.float32)
    out_ref[...] = jnp.concatenate([s_cat, sig, tail], axis=1)


def hamiltonian_classifier_forward(x, seq_lengths, u_re, u_im):
    """x: (B, S, E) f32, seq_lengths: (B,) int, u_re/u_im: (D, D) f32."""
    B, S, E = x.shape
    n_wires = (E - 1).bit_length()
    D = 2 ** n_wires
    assert D == E, "emb_dim chosen as a power of two so no Hamiltonian padding"
    # TODO(synk): for emb_dim not a power of two, zero-pad the feature dim to D
    # before the Gram einsum and the unitary apply.

    pack_w = ((2 * D + 1 + 127) // 128) * 128                 # lane-dense slab

    lens = jnp.maximum(seq_lengths, 1).astype(jnp.float32)    # seq_lengths[==0] = 1
    sqrt_inv_len = lax.rsqrt(lens).reshape(B, 1, 1)           # folded into x in-kernel
    # TODO(synk): once batch tiling is introduced, pass lengths via SMEM scalar
    # prefetch (PrefetchScalarGridSpec) instead of this tiny VMEM DMA.

    u_cat = jnp.concatenate([u_re, u_im], axis=1)             # (D, 2D) -> one matmul

    packed = pl.pallas_call(
        _ham_classifier_kernel,
        grid=(1,),
        in_specs=[
            pl.BlockSpec((B, S, E), lambda i: (0, 0, 0)),
            pl.BlockSpec((B, 1, 1), lambda i: (0, 0, 0)),
            pl.BlockSpec((D, 2 * D), lambda i: (0, 0)),
        ],
        out_specs=pl.BlockSpec((B, pack_w), lambda i: (0, 0)),
        out_shape=jax.ShapeDtypeStruct((B, pack_w), jnp.float32),
        compiler_params=pltpu.CompilerParams(
            dimension_semantics=("arbitrary",)),
        # TODO(synk): when B grows (hundreds of samples to amortize launch
        # overhead), tile the batch dim with a 'parallel' grid axis and a
        # two-pass design (pass 1: partial sum-of-squares over batch shards,
        # pass 2: normalize + quadratic form) since the batch-dim F.normalize
        # couples all samples; size tiles / vmem_limit_bytes for v7x's 64 MiB
        # VMEM rather than v6e's 128 MiB.
    )(x.astype(jnp.float32), sqrt_inv_len, u_cat)

    sre = packed[:, :D]
    sim = packed[:, D:2 * D]
    ev = packed[:, 2 * D]
    state = (sre + 1j * sim).astype(jnp.complex64)            # torch complex64 state
    return ev, state


def make_circuit_unitary(key, dim):
    """Deterministic stand-in for the external `Circuit` module: a fixed
    dim x dim complex unitary built on host via QR of a random complex matrix."""
    # TODO(synk): the original parameterized quantum Circuit is an external
    # module; it is modeled here as a fixed unitary applied by matmul.
    k1, k2 = jax.random.split(key)
    a = np.asarray(jax.random.normal(k1, (dim, dim), dtype=jnp.float32))
    b = np.asarray(jax.random.normal(k2, (dim, dim), dtype=jnp.float32))
    q, _ = np.linalg.qr(a.astype(np.float64) + 1j * b.astype(np.float64))
    return (jnp.asarray(q.real, dtype=jnp.float32),
            jnp.asarray(q.imag, dtype=jnp.float32))


if __name__ == "__main__":
    B, S, E = 2, 8, 32            # batch, sent_len, emb_dim
    n_wires = (E - 1).bit_length()
    D = 2 ** n_wires              # 32

    key = jax.random.PRNGKey(0)
    kx, kc = jax.random.split(key)

    x = jax.random.normal(kx, (B, S, E), dtype=jnp.float32)
    seq_lengths = jnp.array([5, 8], dtype=jnp.int32)
    u_re, u_im = make_circuit_unitary(kc, D)

    ev, state = hamiltonian_classifier_forward(x, seq_lengths, u_re, u_im)
    jax.block_until_ready((ev, state))

    assert ev.shape == (B,) and ev.dtype == jnp.float32
    assert state.shape == (B, D) and state.dtype == jnp.complex64
    assert bool(jnp.all(jnp.isfinite(ev)))
    assert bool(jnp.all((ev >= 0.0) & (ev <= 1.0)))
    print("KERNEL_OK")
</pallas_src>

<mosaic_0001>
module attributes {stable_mosaic.version = 11 : i64} {
  func.func @_ham_classifier_kernel(%arg0: i32, %arg1: memref<2x8x32xf32, #tpu.memory_space<vmem>>, %arg2: memref<2x1x1xf32, #tpu.memory_space<vmem>>, %arg3: memref<32x64xf32, #tpu.memory_space<vmem>>, %arg4: memref<2x128xf32, #tpu.memory_space<vmem>>) attributes {dimension_semantics = [#tpu.dimension_semantics<arbitrary>], iteration_bounds = array<i64: 1>, scalar_prefetch = 0 : i64, scratch_operands = 0 : i64, tpu.core_type = #tpu.core_type<tc>, window_params = [{pipeline_mode = #tpu.pipeline_mode<synchronous>, transform_indices = @transform_0, window_bounds = array<i64: 2, 8, 32>}, {pipeline_mode = #tpu.pipeline_mode<synchronous>, transform_indices = @transform_1, window_bounds = array<i64: 2, 1, 1>}, {pipeline_mode = #tpu.pipeline_mode<synchronous>, transform_indices = @transform_2, window_bounds = array<i64: 32, 64>}, {pipeline_mode = #tpu.pipeline_mode<synchronous>, transform_indices = @transform_3, window_bounds = array<i64: 2, 128>}]} {
    %c0 = arith.constant 0 : index
    %c0_0 = arith.constant 0 : index
    %c0_1 = arith.constant 0 : index
    %0 = vector.load %arg1[%c0, %c0_0, %c0_1] : memref<2x8x32xf32, #tpu.memory_space<vmem>>, vector<2x8x32xf32>
    %cst = arith.constant dense<0.000000e+00> : vector<2x32xf32>
    %1 = vector.multi_reduction <add>, %0, %cst [1] : vector<2x8x32xf32> to vector<2x32xf32>
    %cst_2 = arith.constant 1.250000e-01 : f32
    %2 = vector.broadcast %cst_2 : f32 to vector<2x32xf32>
    %3 = arith.mulf %1, %2 : vector<2x32xf32>
    %4 = arith.mulf %3, %3 : vector<2x32xf32>
    %cst_3 = arith.constant dense<0.000000e+00> : vector<2xf32>
    %5 = vector.multi_reduction <add>, %4, %cst_3 [1] : vector<2x32xf32> to vector<2xf32>
    %6 = vector.shape_cast %5 : vector<2xf32> to vector<2x1xf32>
    %7 = tpu.iota {dimensions = array<i32: 1>} : vector<2x32xi32>
    %c0_i32 = arith.constant 0 : i32
    %8 = vector.broadcast %c0_i32 : i32 to vector<2x32xi32>
    %9 = arith.cmpi eq, %7, %8 : vector<2x32xi32>
    %10 = arith.extui %9 : vector<2x32xi1> to vector<2x32xi32>
    %11 = arith.sitofp %10 : vector<2x32xi32> to vector<2x32xf32>
    %cst_4 = arith.constant 0.000000e+00 : f32
    %12 = vector.broadcast %cst_4 : f32 to vector<2x1xf32>
    %13 = arith.cmpf ole, %6, %12 : vector<2x1xf32>
    %14 = vector.shape_cast %13 : vector<2x1xi1> to vector<2x1xi1>
    %15 = vector.broadcast %14 : vector<2x1xi1> to vector<2x32xi1>
    %16 = arith.select %15, %11, %3 : vector<2x32xi1>, vector<2x32xf32>
    %17 = arith.mulf %16, %16 : vector<2x32xf32>
    %cst_5 = arith.constant dense<0.000000e+00> : vector<2xf32>
    %18 = vector.multi_reduction <add>, %17, %cst_5 [1] : vector<2x32xf32> to vector<2xf32>
    %19 = vector.shape_cast %18 : vector<2xf32> to vector<2x1xf32>
    %cst_6 = arith.constant 1.000000e-24 : f32
    %20 = vector.broadcast %cst_6 : f32 to vector<2x1xf32>
    %21 = arith.maximumf %19, %20 : vector<2x1xf32>
    %22 = math.rsqrt %21 : vector<2x1xf32>
    %23 = vector.broadcast %22 : vector<2x1xf32> to vector<2x32xf32>
    %24 = arith.mulf %16, %23 : vector<2x32xf32>
    %c0_7 = arith.constant 0 : index
    %c0_8 = arith.constant 0 : index
    %25 = vector.load %arg3[%c0_7, %c0_8] : memref<32x64xf32, #tpu.memory_space<vmem>>, vector<32x64xf32>
    %cst_9 = arith.constant dense<0.000000e+00> : vector<2x64xf32>
    %26 = tpu.matmul %24, %25, %cst_9 {dimension_numbers = #tpu.dot_dimension_numbers<[1], [0], [0], [1], [0, 0, 1, 1], [], []>} : vector<2x32xf32>, vector<32x64xf32>, vector<2x64xf32> -> vector<2x64xf32>
    %27 = vector.extract_strided_slice %26 {offsets = [0, 0], sizes = [2, 32], strides = [1, 1]} : vector<2x64xf32> to vector<2x32xf32>
    %28 = vector.shape_cast %27 : vector<2x32xf32> to vector<2x1x32xf32>
    %29 = vector.extract_strided_slice %26 {offsets = [0, 32], sizes = [2, 32], strides = [1, 1]} : vector<2x64xf32> to vector<2x32xf32>
    %30 = vector.shape_cast %29 : vector<2x32xf32> to vector<2x1x32xf32>
    %c0_10 = arith.constant 0 : index
    %c0_11 = arith.constant 0 : index
    %c0_12 = arith.constant 0 : index
    %31 = vector.load %arg2[%c0_10, %c0_11, %c0_12] : memref<2x1x1xf32, #tpu.memory_space<vmem>>, vector<2x1x1xf32>
    %32 = vector.broadcast %31 : vector<2x1x1xf32> to vector<2x8x32xf32>
    %33 = arith.mulf %0, %32 : vector<2x8x32xf32>
    "tpu.trace_start"() <{level = 10 : i32, message = "bsi,bsj->bij"}> : () -> ()
    %cst_13 = arith.constant dense<0.000000e+00> : vector<2x32x32xf32>
    %34 = tpu.matmul %33, %33, %cst_13 {dimension_numbers = #tpu.dot_dimension_numbers<[1], [1], [2], [2], [0, 0, 0, 2, 1, 2], [0], [0]>} : vector<2x8x32xf32>, vector<2x8x32xf32>, vector<2x32x32xf32> -> vector<2x32x32xf32>
    "tpu.trace_stop"() : () -> ()
    %35 = arith.mulf %34, %34 : vector<2x32x32xf32>
    %cst_14 = arith.constant dense<0.000000e+00> : vector<32x32xf32>
    %36 = vector.multi_reduction <add>, %35, %cst_14 [0] : vector<2x32x32xf32> to vector<32x32xf32>
    %37 = vector.shape_cast %36 : vector<32x32xf32> to vector<1x32x32xf32>
    %cst_15 = arith.constant 1.000000e-24 : f32
    %38 = vector.broadcast %cst_15 : f32 to vector<1x32x32xf32>
    %39 = arith.maximumf %37, %38 : vector<1x32x32xf32>
    %40 = math.rsqrt %39 : vector<1x32x32xf32>
    %41 = vector.broadcast %40 : vector<1x32x32xf32> to vector<2x32x32xf32>
    %42 = arith.mulf %34, %41 : vector<2x32x32xf32>
    "tpu.trace_start"() <{level = 10 : i32, message = "bkj,bij->bki"}> : () -> ()
    %cst_16 = arith.constant dense<0.000000e+00> : vector<2x1x32xf32>
    %43 = tpu.matmul %28, %42, %cst_16 {dimension_numbers = #tpu.dot_dimension_numbers<[2], [2], [1], [1], [0, 0, 0, 1, 1, 1], [0], [0]>} : vector<2x1x32xf32>, vector<2x32x32xf32>, vector<2x1x32xf32> -> vector<2x1x32xf32>
    %cst_17 = arith.constant dense<0.000000e+00> : vector<2x1x32xf32>
    %44 = tpu.matmul %30, %42, %cst_17 {dimension_numbers = #tpu.dot_dimension_numbers<[2], [2], [1], [1], [0, 0, 0, 1, 1, 1], [0], [0]>} : vector<2x1x32xf32>, vector<2x32x32xf32>, vector<2x1x32xf32> -> vector<2x1x32xf32>
    "tpu.trace_stop"() : () -> ()
    %45 = arith.mulf %43, %28 : vector<2x1x32xf32>
    %46 = arith.mulf %44, %30 : vector<2x1x32xf32>
    %47 = arith.addf %45, %46 : vector<2x1x32xf32>
    %cst_18 = arith.constant dense<0.000000e+00> : vector<2x1xf32>
    %48 = vector.multi_reduction <add>, %47, %cst_18 [2] : vector<2x1x32xf32> to vector<2x1xf32>
    %49 = vector.shape_cast %48 : vector<2x1xf32> to vector<2x1x1xf32>
    %50 = vector.shape_cast %49 : vector<2x1x1xf32> to vector<2x1xf32>
    %51 = math.absf %50 : vector<2x1xf32>
    %cst_19 = arith.constant 0.000000e+00 : f32
    %52 = vector.broadcast %cst_19 : f32 to vector<2x1xf32>
    %53 = arith.subf %52, %51 : vector<2x1xf32>
    %54 = math.exp %53 : vector<2x1xf32>
    %cst_20 = arith.constant 0.000000e+00 : f32
    %55 = vector.broadcast %cst_20 : f32 to vector<2x1xf32>
    %56 = arith.cmpf oge, %50, %55 : vector<2x1xf32>
    %cst_21 = arith.constant 1.000000e+00 : f32
    %57 = vector.broadcast %cst_21 : f32 to vector<2x1xf32>
    %58 = arith.addf %57, %54 : vector<2x1xf32>
    %cst_22 = arith.constant 1.000000e+00 : f32
    %59 = vector.broadcast %cst_22 : f32 to vector<2x1xf32>
    %60 = arith.divf %59, %58 : vector<2x1xf32>
    %cst_23 = arith.constant 1.000000e+00 : f32
    %61 = vector.broadcast %cst_23 : f32 to vector<2x1xf32>
    %62 = arith.addf %61, %54 : vector<2x1xf32>
    %63 = arith.divf %54, %62 : vector<2x1xf32>
    %64 = arith.select %56, %60, %63 : vector<2x1xi1>, vector<2x1xf32>
    %cst_24 = arith.constant 0.000000e+00 : f32
    %65 = vector.broadcast %cst_24 : f32 to vector<2x63xf32>
    %66 = tpu.concatenate %26, %64, %65 in 1 : vector<2x64xf32>, vector<2x1xf32>, vector<2x63xf32> -> vector<2x128xf32>
    %c0_25 = arith.constant 0 : index
    %c0_26 = arith.constant 0 : index
    %67 = vector.load %arg4[%c0_25, %c0_26] : memref<2x128xf32, #tpu.memory_space<vmem>>, vector<2x128xf32>
    tpu.vector_store %arg4[%c0_25, %c0_26], %66 {strides = array<i32>} : memref<2x128xf32, #tpu.memory_space<vmem>>, vector<2x128xf32>,
    return
  }
  func.func @transform_0(%arg0: i32) -> (i32, i32, i32) {
    %c0_i32 = arith.constant 0 : i32
    %c0_i32_0 = arith.constant 0 : i32
    %c0_i32_1 = arith.constant 0 : i32
    %c0_i32_2 = arith.constant 0 : i32
    return %c0_i32, %c0_i32_0, %c0_i32_1 : i32, i32, i32
  }
  func.func @transform_1(%arg0: i32) -> (i32, i32, i32) {
    %c0_i32 = arith.constant 0 : i32
    %c0_i32_0 = arith.constant 0 : i32
    %c0_i32_1 = arith.constant 0 : i32
    %c0_i32_2 = arith.constant 0 : i32
    return %c0_i32, %c0_i32_0, %c0_i32_1 : i32, i32, i32
  }
  func.func @transform_2(%arg0: i32) -> (i32, i32) {
    %c0_i32 = arith.constant 0 : i32
    %c0_i32_0 = arith.constant 0 : i32
    %c0_i32_1 = arith.constant 0 : i32
    return %c0_i32, %c0_i32_0 : i32, i32
  }
  func.func @transform_3(%arg0: i32) -> (i32, i32) {
    %c0_i32 = arith.constant 0 : i32
    %c0_i32_0 = arith.constant 0 : i32
    %c0_i32_1 = arith.constant 0 : i32
    return %c0_i32, %c0_i32_0 : i32, i32
  }
}

</mosaic_0001>

<llo_original>
// kernel: tpu_custom_call.1
$region0: #{tpu_custom_call.1}
  #allocation0 [shape = 'u32[]', space=smem, size = 0x4, offset = 0x4, fixed_abs, tag = 'smem constant byte address 0x4 - core index']
  #allocation1 [shape = 'u32[144,128]{1,0:T(1,128)}', space=vmem, size = 0x12000, scoped, tag = 'internal scratch']
  %s0 = inlined_call_operand.hbm [shape: f32[2,8,32], index: 0, kind: input, shape index: {}]
  %s1 = inlined_call_operand.vmem [shape: f32[2,1,1], index: 1, kind: input, shape index: {}]
  %s2 = inlined_call_operand.hbm [shape: f32[32,64], index: 2, kind: input, shape index: {}]
  %s3 = inlined_call_operand.hbm [shape: f32[2,128], index: 3, kind: output, shape index: {}]
  %s4 = sld [smem:[#allocation0]]
  $region30: #{tpu_custom_call.1} parent=0
    _
  %s6 = ssub.s32 1, %s4
  %s7 = scalar_select 0, %s6, %s4
  $region1: #{tpu_custom_call.1} parent=0
    #allocation2 [shape = 'u8[8192]{0}', space=vmem, size = 0x2000, scoped, tag = 'input window, operand 0, single buffered']
    #allocation3 [shape = 's32[1]{0}', space=sflag, size = 0x4, scoped, tag = 'scoped memory for tpu_custom_call.1']
    #allocation4 [shape = 's32[1]{0}', space=sflag, size = 0x4, scoped, tag = 'scoped memory for tpu_custom_call.1']
    #allocation5 [shape = 'u8[16384]{0}', space=vmem, size = 0x4000, scoped, tag = 'input window, operand 2, single buffered']
    #allocation6 [shape = 's32[1]{0}', space=sflag, size = 0x4, scoped, tag = 'scoped memory for tpu_custom_call.1']
    #allocation7 [shape = 'u8[1024]{0}', space=vmem, size = 0x400, scoped, tag = 'output window, operand 0, single buffered']
    %8 = vsyncpa [#allocation3], 0
    %9 = vsyncpa [#allocation6], 0
    %10 = vsyncpa [#allocation4], 0
    // Predicated region
    $region2: #{tpu_custom_call.1} parent=1 // pred_check
      _
    $region3: #{tpu_custom_call.1} parent=1 // pred_check_branch
      %12 = sbr.rel (0) target = $region5
    $region4: #{tpu_custom_call.1} parent=1 // pred_region
      %s14 = ssub.s32 256, 256
      %15 = vsyncadd [#allocation3], %s14
      %s16 = sshll.u32 [#allocation2], 4
      %s17 = int_to_ptr.vmem [resolvable:$true] %s16
      %22 = dma.hbm_to_vmem [thread:$0]  %s0, 256, %s17, [#allocation3], 128, 128, 8
    $region5: #{tpu_custom_call.1} parent=1 // pred_fallthru
      _
    // Predicated region
    $region6: #{tpu_custom_call.1} parent=1 // pred_check
      _
    $region7: #{tpu_custom_call.1} parent=1 // pred_check_branch
      %24 = sbr.rel (0) target = $region9
    $region8: #{tpu_custom_call.1} parent=1 // pred_region
      _
    $region9: #{tpu_custom_call.1} parent=1 // pred_fallthru
      _
    // Predicated region
    $region10: #{tpu_custom_call.1} parent=1 // pred_check
      _
    $region11: #{tpu_custom_call.1} parent=1 // pred_check_branch
      %26 = sbr.rel (0) target = $region13
    $region12: #{tpu_custom_call.1} parent=1 // pred_region
      %s28 = ssub.s32 512, 512
      %29 = vsyncadd [#allocation6], %s28
      %s30 = sshll.u32 [#allocation5], 4
      %s31 = int_to_ptr.vmem [resolvable:$true] %s30
      %36 = dma.hbm_to_vmem [thread:$0]  %s2, 512, %s31, [#allocation6], 128, 128, 8
    $region13: #{tpu_custom_call.1} parent=1 // pred_fallthru
      _
    // Predicated region
    $region14: #{tpu_custom_call.1} parent=1 // pred_check
      _
    $region15: #{tpu_custom_call.1} parent=1 // pred_check_branch
      %38 = sbr.rel (0) target = $region17
    $region16: #{tpu_custom_call.1} parent=1 // pred_region
      %39 = dma.done [#allocation3], 256
    $region17: #{tpu_custom_call.1} parent=1 // pred_fallthru
      _
    // Predicated region
    $region18: #{tpu_custom_call.1} parent=1 // pred_check
      _
    $region19: #{tpu_custom_call.1} parent=1 // pred_check_branch
      %41 = sbr.rel (0) target = $region21
    $region20: #{tpu_custom_call.1} parent=1 // pred_region
      %42 = dma.done [#allocation6], 512
    $region21: #{tpu_custom_call.1} parent=1 // pred_fallthru
      _
    %v43 = vld [vmem:[#allocation2] sm:$0xff]
    %v44 = vld [vmem:[#allocation2 + $0x8] sm:$0xff]
    %vm45 = vcmask 261120
    %v46 = vsel %vm45, %v43, 0.0
    %v47 = vrot.slane %v46, 4
    %v48 = vadd.f32 %v46, %v47
    %v49 = vrot.slane %v48, 2
    %v50 = vadd.f32 %v48, %v49
    %v51 = vrot.slane %v50, 1
    %v52 = vadd.f32 %v50, %v51
    %v53 = vsel %vm45, %v44, 0.0
    %v54 = vrot.slane %v53, 4
    %v55 = vadd.f32 %v53, %v54
    %v56 = vrot.slane %v55, 2
    %v57 = vadd.f32 %v55, %v56
    %v58 = vrot.slane %v57, 1
    %v59 = vadd.f32 %v57, %v58
    %v60 = vmul.f32 %v52, 0.125
    %v61 = vmul.f32 %v59, 0.125
    %v62 = vmul.f32 %v60, %v60
    %v63 = vmul.f32 %v61, %v61
    %vm66 = vcmask 1041409
    %v67 = vsel %vm66, %v63, %v62
    %vm69 = vcmask 254976
    %v70 = vsel %vm69, %v67, 0.0
    %71 = vadd.xlane.f32.xlu0 %v70
    %v72 = vpop.xlane.xlu0 %71
    %v73 = vlaneseq
    %v74 = vand.u32 %v73, 127
    %vm75 = vcmp.eq.s32.totalorder %v74, 0
    %v76 = vsel %vm75, 1, 0
    %v77 = vcvt.s32.f32 %v76
    %vm78 = vcmp.le.f32.partialorder %v72, 0.0
    %v79 = vsel %vm78, 1, 0
    %vm80 = vcmp.eq.s32.totalorder %v79, 1
    %v83 = vsel %vm66, %v61, %v60
    %v85 = vsel %vm80, %v77, %v83
    %v86 = vmul.f32 %v85, %v85
    %v87 = vsel %vm69, %v86, 0.0
    %88 = vadd.xlane.f32.xlu0 %v87
    %v89 = vpop.xlane.xlu0 %88
    %v90 = vmax.f32 %v89, 1e-24
    %v91 = vrsqrt.pop %v90
    %v92 = vmul.f32 %v85, %v91
    %v93 = vld [vmem:[#allocation5] sm:$0xff]
    %v94 = vld [vmem:[#allocation5 + $0x8] sm:$0xff]
    %v95 = vld [vmem:[#allocation5 + $0x10] sm:$0xff]
    %v96 = vld [vmem:[#allocation5 + $0x18] sm:$0xff]
    %v98 = vsel %vm45, %v92, 0
    %100 = vmatprep.subr.mxu0 0.0
    %101 = vmatpush1.msra.mxu0 0.0
    %102 = vmatprep.subr.mxu0 0.0
    %103 = vmatpush1.msra.mxu0 0.0
    %104 = vmatprep.subr.mxu0 0.0
    %105 = vmatpush1.msra.mxu0 0.0
    %106 = vmatprep.subr.mxu0 0.0
    %107 = vmatpush1.msra.mxu0 0.0
    %108 = vmatprep.subr.mxu0 0.0
    %109 = vmatpush1.msra.mxu0 0.0
    %110 = vmatprep.subr.mxu0 0.0
    %111 = vmatpush1.msra.mxu0 0.0
    %112 = vmatprep.subr.mxu0 0.0
    %113 = vmatpush1.msra.mxu0 0.0
    %114 = vmatprep.subr.mxu0 0.0
    %115 = vmatpush1.msra.mxu0 0.0
    %116 = vmatprep.subr.mxu0 0.0
    %117 = vmatpush1.msra.mxu0 0.0
    %118 = vmatprep.subr.mxu0 0.0
    %119 = vmatpush1.msra.mxu0 0.0
    %120 = vmatprep.subr.mxu0 0.0
    %121 = vmatpush1.msra.mxu0 0.0
    %122 = vmatprep.subr.mxu0 0.0
    %123 = vmatpush1.msra.mxu0 0.0
    %124 = vmatprep.subr.mxu0 0.0
    %125 = vmatpush1.msra.mxu0 %v96
    %126 = vmatprep.subr.mxu0 0.0
    %127 = vmatpush1.msra.mxu0 %v95
    %128 = vmatprep.subr.mxu0 0.0
    %129 = vmatpush1.msra.mxu0 %v94
    %130 = vmatprep.subr.mxu0 0.0
    %131 = vmatpush1.msra.mxu0 %v93
    %132 = vmatprep.subr.mxu0 0.0
    %133 = vmatpush2.msra.mxu0 0.0
    %134 = vmatprep.subr.mxu0 0.0
    %135 = vmatpush2.msra.mxu0 0.0
    %136 = vmatprep.subr.mxu0 0.0
    %137 = vmatpush2.msra.mxu0 0.0
    %138 = vmatprep.subr.mxu0 0.0
    %139 = vmatpush2.msra.mxu0 0.0
    %140 = vmatprep.subr.mxu0 0.0
    %141 = vmatpush2.msra.mxu0 0.0
    %142 = vmatprep.subr.mxu0 0.0
    %143 = vmatpush2.msra.mxu0 0.0
    %144 = vmatprep.subr.mxu0 0.0
    %145 = vmatpush2.msra.mxu0 0.0
    %146 = vmatprep.subr.mxu0 0.0
    %147 = vmatpush2.msra.mxu0 0.0
    %148 = vmatprep.subr.mxu0 0.0
    %149 = vmatpush2.msra.mxu0 0.0
    %150 = vmatprep.subr.mxu0 0.0
    %151 = vmatpush2.msra.mxu0 0.0
    %152 = vmatprep.subr.mxu0 0.0
    %153 = vmatpush2.msra.mxu0 0.0
    %154 = vmatprep.subr.mxu0 0.0
    %155 = vmatpush2.msra.mxu0 0.0
    %156 = vmatprep.subr.mxu0 0.0
    %157 = vmatpush2.msra.mxu0 0.0
    %158 = vmatprep.subr.mxu0 0.0
    %159 = vmatpush2.msra.mxu0 0.0
    %160 = vmatprep.subr.mxu0 0.0
    %161 = vmatpush2.msra.mxu0 0.0
    %162 = vmatprep.subr.mxu0 0.0
    %163 = vmatpush2.msra.mxu0 0.0
    %164 = vmatprep.mubr.f32.mxu0 0.0
    %165 = vmatmul.mubr.f32.gmra.mxu0 %v98
    %v166 = vpop.f32.mrf.mxu0
    %v167 = vadd.f32 0.0, %v166
    %v168 = vpop.f32.mrf.mxu0
    %169 = vdwg.mxu0
    %v172 = vunpack.c.l.s4 1966171168
    %v173 = vunpack.c.0.s8 %v172
    %v174 = vlaneseq
    %v175 = vshrl.u32 %v174, 7
    %v176 = vsub.s32 %v173, %v175
    %v177 = vrot.slane %v167, %v176
    %v178 = vcombine.high %v177, %v177
    %v180 = vunpack.c.l.s4 1966171168
    %v181 = vunpack.c.0.s8 %v180
    %v182 = vlaneseq
    %v183 = vshrl.u32 %v182, 7
    %v184 = vsub.s32 %v181, %v183
    %v185 = vrot.slane %v177, %v184
    %v187 = vunpack.c.l.s4 1966171168
    %v188 = vunpack.c.0.s8 %v187
    %v189 = vlaneseq
    %v190 = vshrl.u32 %v189, 7
    %v191 = vsub.s32 %v188, %v190
    %v192 = vrot.slane %v178, %v191
    %v195 = vld [vmem:[%s1] sm:$0x1]
    %v196 = vld [vmem:[%s1 + $0x1] sm:$0x1]
    %v199 = vlaneseq
    %v200 = vshrl.u32 %v199, 7
    %v201 = vsub.s32 0, %v200
    %v202 = vrot.slane %v195, %v201
    %v203 = vlaneseq
    %v204 = vshrl.u32 %v203, 7
    %v205 = vsub.s32 0, %v204
    %v206 = vrot.slane %v196, %v205
    %207 = vset.pattern.permute.xlu0 0
    %208 = vperm.xlu0 %207, %v202
    %v209 = vpop.permute.xlu0 %208
    %211 = vset.pattern.permute.xlu0 0
    %212 = vperm.xlu0 %211, %v206
    %v213 = vpop.permute.xlu0 %212
    %v215 = vmul.f32 %v43, %v209
    %v216 = vmul.f32 %v44, %v213
    %217 = vxpose.xlu0.b32.start [1/16] %v215, 128
    %218 = vxpose.xlu0.b32.cont [2/16] 0.0, 128
    %219 = vxpose.xlu0.b32.cont [3/16] 0.0, 128
    %220 = vxpose.xlu0.b32.cont [4/16] 0.0, 128
    %221 = vxpose.xlu0.b32.cont [5/16] 0.0, 128
    %222 = vxpose.xlu0.b32.cont [6/16] 0.0, 128
    %223 = vxpose.xlu0.b32.cont [7/16] 0.0, 128
    %224 = vxpose.xlu0.b32.cont [8/16] 0.0, 128
    %225 = vxpose.xlu0.b32.cont [9/16] 0.0, 128
    %226 = vxpose.xlu0.b32.cont [10/16] 0.0, 128
    %227 = vxpose.xlu0.b32.cont [11/16] 0.0, 128
    %228 = vxpose.xlu0.b32.cont [12/16] 0.0, 128
    %229 = vxpose.xlu0.b32.cont [13/16] 0.0, 128
    %230 = vxpose.xlu0.b32.cont [14/16] 0.0, 128
    %231 = vxpose.xlu0.b32.cont [15/16] 0.0, 128
    %232 = vxpose.xlu0.b32.end [16/16] 0.0, 128
    %v233 = vpop.trf.xlu0
    %v234 = vpop.trf.xlu0
    %v235 = vpop.trf.xlu0
    %v236 = vpop.trf.xlu0
    %v237 = vpop.trf.xlu0
    %v238 = vpop.trf.xlu0
    %v239 = vpop.trf.xlu0
    %v240 = vpop.trf.xlu0
    %v241 = vpop.trf.xlu0
    %v242 = vpop.trf.xlu0
    %v243 = vpop.trf.xlu0
    %v244 = vpop.trf.xlu0
    %v245 = vpop.trf.xlu0
    %v246 = vpop.trf.xlu0
    %v247 = vpop.trf.xlu0
    %v248 = vpop.trf.xlu0
    %vm249 = vcmask 64512
    %v251 = vsel %vm249, %v233, 0
    %v254 = vsel %vm249, %v234, 0
    %v257 = vsel %vm249, %v235, 0
    %v260 = vsel %vm249, %v236, 0
    %262 = vmatprep.subr.mxu0 0.0
    %263 = vmatpush1.msra.mxu0 0.0
    %264 = vmatprep.subr.mxu0 0.0
    %265 = vmatpush1.msra.mxu0 0.0
    %266 = vmatprep.subr.mxu0 0.0
    %267 = vmatpush1.msra.mxu0 0.0
    %268 = vmatprep.subr.mxu0 0.0
    %269 = vmatpush1.msra.mxu0 0.0
    %270 = vmatprep.subr.mxu0 0.0
    %271 = vmatpush1.msra.mxu0 0.0
    %272 = vmatprep.subr.mxu0 0.0
    %273 = vmatpush1.msra.mxu0 0.0
    %274 = vmatprep.subr.mxu0 0.0
    %275 = vmatpush1.msra.mxu0 0.0
    %276 = vmatprep.subr.mxu0 0.0
    %277 = vmatpush1.msra.mxu0 0.0
    %278 = vmatprep.subr.mxu0 0.0
    %279 = vmatpush1.msra.mxu0 0.0
    %280 = vmatprep.subr.mxu0 0.0
    %281 = vmatpush1.msra.mxu0 0.0
    %282 = vmatprep.subr.mxu0 0.0
    %283 = vmatpush1.msra.mxu0 0.0
    %284 = vmatprep.subr.mxu0 0.0
    %285 = vmatpush1.msra.mxu0 0.0
    %286 = vmatprep.subr.mxu0 0.0
    %287 = vmatpush1.msra.mxu0 0.0
    %288 = vmatprep.subr.mxu0 0.0
    %289 = vmatpush1.msra.mxu0 0.0
    %290 = vmatprep.subr.mxu0 0.0
    %291 = vmatpush1.msra.mxu0 0.0
    %292 = vmatprep.subr.mxu0 0.0
    %293 = vmatpush1.msra.mxu0 %v215
    %294 = vmatprep.subr.mxu0 0.0
    %295 = vmatpush2.msra.mxu0 0.0
    %296 = vmatprep.subr.mxu0 0.0
    %297 = vmatpush2.msra.mxu0 0.0
    %298 = vmatprep.subr.mxu0 0.0
    %299 = vmatpush2.msra.mxu0 0.0
    %300 = vmatprep.subr.mxu0 0.0
    %301 = vmatpush2.msra.mxu0 0.0
    %302 = vmatprep.subr.mxu0 0.0
    %303 = vmatpush2.msra.mxu0 0.0
    %304 = vmatprep.subr.mxu0 0.0
    %305 = vmatpush2.msra.mxu0 0.0
    %306 = vmatprep.subr.mxu0 0.0
    %307 = vmatpush2.msra.mxu0 0.0
    %308 = vmatprep.subr.mxu0 0.0
    %309 = vmatpush2.msra.mxu0 0.0
    %310 = vmatprep.subr.mxu0 0.0
    %311 = vmatpush2.msra.mxu0 0.0
    %312 = vmatprep.subr.mxu0 0.0
    %313 = vmatpush2.msra.mxu0 0.0
    %314 = vmatprep.subr.mxu0 0.0
    %315 = vmatpush2.msra.mxu0 0.0
    %316 = vmatprep.subr.mxu0 0.0
    %317 = vmatpush2.msra.mxu0 0.0
    %318 = vmatprep.subr.mxu0 0.0
    %319 = vmatpush2.msra.mxu0 0.0
    %320 = vmatprep.subr.mxu0 0.0
    %321 = vmatpush2.msra.mxu0 0.0
    %322 = vmatprep.subr.mxu0 0.0
    %323 = vmatpush2.msra.mxu0 0.0
    %324 = vmatprep.subr.mxu0 0.0
    %325 = vmatpush2.msra.mxu0 0.0
    %326 = vmatprep.mubr.f32.mxu0 0.0
    %327 = vmatmul.mubr.f32.gmra.mxu0 %v251
    %v328 = vpop.f32.mrf.mxu0
    %v329 = vadd.f32 0.0, %v328
    %v330 = vpop.f32.mrf.mxu0
    %331 = vmatprep.mubr.f32.mxu0 0.0
    %332 = vmatmul.mubr.f32.gmra.mxu0 %v254
    %v333 = vpop.f32.mrf.mxu0
    %v334 = vadd.f32 0.0, %v333
    %v335 = vpop.f32.mrf.mxu0
    %336 = vmatprep.mubr.f32.mxu0 0.0
    %337 = vmatmul.mubr.f32.gmra.mxu0 %v257
    %v338 = vpop.f32.mrf.mxu0
    %v339 = vadd.f32 0.0, %v338
    %v340 = vpop.f32.mrf.mxu0
    %341 = vmatprep.mubr.f32.mxu0 0.0
    %342 = vmatmul.mubr.f32.gmra.mxu0 %v260
    %v343 = vpop.f32.mrf.mxu0
    %v344 = vadd.f32 0.0, %v343
    %v345 = vpop.f32.mrf.mxu0
    %346 = vdwg.mxu0
    %347 = vxpose.xlu0.b32.start [1/16] %v216, 128
    %348 = vxpose.xlu0.b32.cont [2/16] 0.0, 128
    %349 = vxpose.xlu0.b32.cont [3/16] 0.0, 128
    %350 = vxpose.xlu0.b32.cont [4/16] 0.0, 128
    %351 = vxpose.xlu0.b32.cont [5/16] 0.0, 128
    %352 = vxpose.xlu0.b32.cont [6/16] 0.0, 128
    %353 = vxpose.xlu0.b32.cont [7/16] 0.0, 128
    %354 = vxpose.xlu0.b32.cont [8/16] 0.0, 128
    %355 = vxpose.xlu0.b32.cont [9/16] 0.0, 128
    %356 = vxpose.xlu0.b32.cont [10/16] 0.0, 128
    %357 = vxpose.xlu0.b32.cont [11/16] 0.0, 128
    %358 = vxpose.xlu0.b32.cont [12/16] 0.0, 128
    %359 = vxpose.xlu0.b32.cont [13/16] 0.0, 128
    %360 = vxpose.xlu0.b32.cont [14/16] 0.0, 128
    %361 = vxpose.xlu0.b32.cont [15/16] 0.0, 128
    %362 = vxpose.xlu0.b32.end [16/16] 0.0, 128
    %v363 = vpop.trf.xlu0
    %v364 = vpop.trf.xlu0
    %v365 = vpop.trf.xlu0
    %v366 = vpop.trf.xlu0
    %v367 = vpop.trf.xlu0
    %v368 = vpop.trf.xlu0
    %v369 = vpop.trf.xlu0
    %v370 = vpop.trf.xlu0
    %v371 = vpop.trf.xlu0
    %v372 = vpop.trf.xlu0
    %v373 = vpop.trf.xlu0
    %v374 = vpop.trf.xlu0
    %v375 = vpop.trf.xlu0
    %v376 = vpop.trf.xlu0
    %v377 = vpop.trf.xlu0
    %v378 = vpop.trf.xlu0
    %v380 = vsel %vm249, %v363, 0
    %v383 = vsel %vm249, %v364, 0
    %v386 = vsel %vm249, %v365, 0
    %v389 = vsel %vm249, %v366, 0
    %391 = vmatprep.subr.mxu0 0.0
    %392 = vmatpush1.msra.mxu0 0.0
    %393 = vmatprep.subr.mxu0 0.0
    %394 = vmatpush1.msra.mxu0 0.0
    %395 = vmatprep.subr.mxu0 0.0
    %396 = vmatpush1.msra.mxu0 0.0
    %397 = vmatprep.subr.mxu0 0.0
    %398 = vmatpush1.msra.mxu0 0.0
    %399 = vmatprep.subr.mxu0 0.0
    %400 = vmatpush1.msra.mxu0 0.0
    %401 = vmatprep.subr.mxu0 0.0
    %402 = vmatpush1.msra.mxu0 0.0
    %403 = vmatprep.subr.mxu0 0.0
    %404 = vmatpush1.msra.mxu0 0.0
    %405 = vmatprep.subr.mxu0 0.0
    %406 = vmatpush1.msra.mxu0 0.0
    %407 = vmatprep.subr.mxu0 0.0
    %408 = vmatpush1.msra.mxu0 0.0
    %409 = vmatprep.subr.mxu0 0.0
    %410 = vmatpush1.msra.mxu0 0.0
    %411 = vmatprep.subr.mxu0 0.0
    %412 = vmatpush1.msra.mxu0 0.0
    %413 = vmatprep.subr.mxu0 0.0
    %414 = vmatpush1.msra.mxu0 0.0
    %415 = vmatprep.subr.mxu0 0.0
    %416 = vmatpush1.msra.mxu0 0.0
    %417 = vmatprep.subr.mxu0 0.0
    %418 = vmatpush1.msra.mxu0 0.0
    %419 = vmatprep.subr.mxu0 0.0
    %420 = vmatpush1.msra.mxu0 0.0
    %421 = vmatprep.subr.mxu0 0.0
    %422 = vmatpush1.msra.mxu0 %v216
    %423 = vmatprep.subr.mxu0 0.0
    %424 = vmatpush2.msra.mxu0 0.0
    %425 = vmatprep.subr.mxu0 0.0
    %426 = vmatpush2.msra.mxu0 0.0
    %427 = vmatprep.subr.mxu0 0.0
    %428 = vmatpush2.msra.mxu0 0.0
    %429 = vmatprep.subr.mxu0 0.0
    %430 = vmatpush2.msra.mxu0 0.0
    %431 = vmatprep.subr.mxu0 0.0
    %432 = vmatpush2.msra.mxu0 0.0
    %433 = vmatprep.subr.mxu0 0.0
    %434 = vmatpush2.msra.mxu0 0.0
    %435 = vmatprep.subr.mxu0 0.0
    %436 = vmatpush2.msra.mxu0 0.0
    %437 = vmatprep.subr.mxu0 0.0
    %438 = vmatpush2.msra.mxu0 0.0
    %439 = vmatprep.subr.mxu0 0.0
    %440 = vmatpush2.msra.mxu0 0.0
    %441 = vmatprep.subr.mxu0 0.0
    %442 = vmatpush2.msra.mxu0 0.0
    %443 = vmatprep.subr.mxu0 0.0
    %444 = vmatpush2.msra.mxu0 0.0
    %445 = vmatprep.subr.mxu0 0.0
    %446 = vmatpush2.msra.mxu0 0.0
    %447 = vmatprep.subr.mxu0 0.0
    %448 = vmatpush2.msra.mxu0 0.0
    %449 = vmatprep.subr.mxu0 0.0
    %450 = vmatpush2.msra.mxu0 0.0
    %451 = vmatprep.subr.mxu0 0.0
    %452 = vmatpush2.msra.mxu0 0.0
    %453 = vmatprep.subr.mxu0 0.0
    %454 = vmatpush2.msra.mxu0 0.0
    %455 = vmatprep.mubr.f32.mxu0 0.0
    %456 = vmatmul.mubr.f32.gmra.mxu0 %v380
    %v457 = vpop.f32.mrf.mxu0
    %v458 = vadd.f32 0.0, %v457
    %v459 = vpop.f32.mrf.mxu0
    %460 = vmatprep.mubr.f32.mxu0 0.0
    %461 = vmatmul.mubr.f32.gmra.mxu0 %v383
    %v462 = vpop.f32.mrf.mxu0
    %v463 = vadd.f32 0.0, %v462
    %v464 = vpop.f32.mrf.mxu0
    %465 = vmatprep.mubr.f32.mxu0 0.0
    %466 = vmatmul.mubr.f32.gmra.mxu0 %v386
    %v467 = vpop.f32.mrf.mxu0
    %v468 = vadd.f32 0.0, %v467
    %v469 = vpop.f32.mrf.mxu0
    %470 = vmatprep.mubr.f32.mxu0 0.0
    %471 = vmatmul.mubr.f32.gmra.mxu0 %v389
    %v472 = vpop.f32.mrf.mxu0
    %v473 = vadd.f32 0.0, %v472
    %v474 = vpop.f32.mrf.mxu0
    %475 = vdwg.mxu0
    %v476 = vmul.f32 %v329, %v329
    %v477 = vmul.f32 %v334, %v334
    %v478 = vmul.f32 %v339, %v339
    %v479 = vmul.f32 %v344, %v344
    %v480 = vmul.f32 %v458, %v458
    %v481 = vmul.f32 %v463, %v463
    %v482 = vmul.f32 %v468, %v468
    %v483 = vmul.f32 %v473, %v473
    %v484 = vsel %vm45, %v476, 0.0
    %v485 = vsel %vm45, %v480, 0.0
    %v486 = vadd.f32 %v484, %v485
    %v487 = vsel %vm45, %v477, 0.0
    %v488 = vsel %vm45, %v481, 0.0
    %v489 = vadd.f32 %v487, %v488
    %v490 = vsel %vm45, %v478, 0.0
    %v491 = vsel %vm45, %v482, 0.0
    %v492 = vadd.f32 %v490, %v491
    %v493 = vsel %vm45, %v479, 0.0
    %v494 = vsel %vm45, %v483, 0.0
    %v495 = vadd.f32 %v493, %v494
    %v496 = vmax.f32 %v486, 1e-24
    %v497 = vmax.f32 %v489, 1e-24
    %v498 = vmax.f32 %v492, 1e-24
    %v499 = vmax.f32 %v495, 1e-24
    %v500 = vrsqrt.pop %v496
    %v501 = vrsqrt.pop %v497
    %v502 = vrsqrt.pop %v498
    %v503 = vrsqrt.pop %v499
    %v504 = vmul.f32 %v329, %v500
    %v505 = vmul.f32 %v334, %v501
    %v506 = vmul.f32 %v339, %v502
    %v507 = vmul.f32 %v344, %v503
    %v508 = vmul.f32 %v458, %v500
    %v509 = vmul.f32 %v463, %v501
    %v510 = vmul.f32 %v468, %v502
    %v511 = vmul.f32 %v473, %v503
    %v512 = vsel %vm45, %v185, 0
    %v515 = vsel %vm45, %v504, 0
    %v518 = vsel %vm45, %v505, 0
    %v521 = vsel %vm45, %v506, 0
    %v524 = vsel %vm45, %v507, 0
    %526 = vmatprep.subr.mxu0 0.0
    %527 = vmatpush1.xpose.msra.mxu0 0.0
    %528 = vmatprep.subr.mxu0 0.0
    %529 = vmatpush1.xpose.msra.mxu0 0.0
    %530 = vmatprep.subr.mxu0 0.0
    %531 = vmatpush1.xpose.msra.mxu0 0.0
    %532 = vmatprep.subr.mxu0 0.0
    %533 = vmatpush1.xpose.msra.mxu0 0.0
    %534 = vmatprep.subr.mxu0 0.0
    %535 = vmatpush1.xpose.msra.mxu0 0.0
    %536 = vmatprep.subr.mxu0 0.0
    %537 = vmatpush1.xpose.msra.mxu0 0.0
    %538 = vmatprep.subr.mxu0 0.0
    %539 = vmatpush1.xpose.msra.mxu0 0.0
    %540 = vmatprep.subr.mxu0 0.0
    %541 = vmatpush1.xpose.msra.mxu0 0.0
    %542 = vmatprep.subr.mxu0 0.0
    %543 = vmatpush1.xpose.msra.mxu0 0.0
    %544 = vmatprep.subr.mxu0 0.0
    %545 = vmatpush1.xpose.msra.mxu0 0.0
    %546 = vmatprep.subr.mxu0 0.0
    %547 = vmatpush1.xpose.msra.mxu0 0.0
    %548 = vmatprep.subr.mxu0 0.0
    %549 = vmatpush1.xpose.msra.mxu0 0.0
    %550 = vmatprep.subr.mxu0 0.0
    %551 = vmatpush1.xpose.msra.mxu0 %v524
    %552 = vmatprep.subr.mxu0 0.0
    %553 = vmatpush1.xpose.msra.mxu0 %v521
    %554 = vmatprep.subr.mxu0 0.0
    %555 = vmatpush1.xpose.msra.mxu0 %v518
    %556 = vmatprep.subr.mxu0 0.0
    %557 = vmatpush1.xpose.msra.mxu0 %v515
    %558 = vmatprep.subr.mxu0 0.0
    %559 = vmatpush2.xpose.msra.mxu0 0.0
    %560 = vmatprep.subr.mxu0 0.0
    %561 = vmatpush2.xpose.msra.mxu0 0.0
    %562 = vmatprep.subr.mxu0 0.0
    %563 = vmatpush2.xpose.msra.mxu0 0.0
    %564 = vmatprep.subr.mxu0 0.0
    %565 = vmatpush2.xpose.msra.mxu0 0.0
    %566 = vmatprep.subr.mxu0 0.0
    %567 = vmatpush2.xpose.msra.mxu0 0.0
    %568 = vmatprep.subr.mxu0 0.0
    %569 = vmatpush2.xpose.msra.mxu0 0.0
    %570 = vmatprep.subr.mxu0 0.0
    %571 = vmatpush2.xpose.msra.mxu0 0.0
    %572 = vmatprep.subr.mxu0 0.0
    %573 = vmatpush2.xpose.msra.mxu0 0.0
    %574 = vmatprep.subr.mxu0 0.0
    %575 = vmatpush2.xpose.msra.mxu0 0.0
    %576 = vmatprep.subr.mxu0 0.0
    %577 = vmatpush2.xpose.msra.mxu0 0.0
    %578 = vmatprep.subr.mxu0 0.0
    %579 = vmatpush2.xpose.msra.mxu0 0.0
    %580 = vmatprep.subr.mxu0 0.0
    %581 = vmatpush2.xpose.msra.mxu0 0.0
    %582 = vmatprep.subr.mxu0 0.0
    %583 = vmatpush2.xpose.msra.mxu0 0.0
    %584 = vmatprep.subr.mxu0 0.0
    %585 = vmatpush2.xpose.msra.mxu0 0.0
    %586 = vmatprep.subr.mxu0 0.0
    %587 = vmatpush2.xpose.msra.mxu0 0.0
    %588 = vmatprep.subr.mxu0 0.0
    %589 = vmatpush2.xpose.msra.mxu0 0.0
    %590 = vmatprep.mubr.f32.mxu0 0.0
    %591 = vmatmul.mubr.f32.gmra.mxu0 %v512
    %v592 = vpop.f32.mrf.mxu0
    %v593 = vadd.f32 0.0, %v592
    %v594 = vpop.f32.mrf.mxu0
    %595 = vdwg.mxu0
    %v596 = vsel %vm45, %v192, 0
    %v599 = vsel %vm45, %v508, 0
    %v602 = vsel %vm45, %v509, 0
    %v605 = vsel %vm45, %v510, 0
    %v608 = vsel %vm45, %v511, 0
    %610 = vmatprep.subr.mxu0 0.0
    %611 = vmatpush1.xpose.msra.mxu0 0.0
    %612 = vmatprep.subr.mxu0 0.0
    %613 = vmatpush1.xpose.msra.mxu0 0.0
    %614 = vmatprep.subr.mxu0 0.0
    %615 = vmatpush1.xpose.msra.mxu0 0.0
    %616 = vmatprep.subr.mxu0 0.0
    %617 = vmatpush1.xpose.msra.mxu0 0.0
    %618 = vmatprep.subr.mxu0 0.0
    %619 = vmatpush1.xpose.msra.mxu0 0.0
    %620 = vmatprep.subr.mxu0 0.0
    %621 = vmatpush1.xpose.msra.mxu0 0.0
    %622 = vmatprep.subr.mxu0 0.0
    %623 = vmatpush1.xpose.msra.mxu0 0.0
    %624 = vmatprep.subr.mxu0 0.0
    %625 = vmatpush1.xpose.msra.mxu0 0.0
    %626 = vmatprep.subr.mxu0 0.0
    %627 = vmatpush1.xpose.msra.mxu0 0.0
    %628 = vmatprep.subr.mxu0 0.0
    %629 = vmatpush1.xpose.msra.mxu0 0.0
    %630 = vmatprep.subr.mxu0 0.0
    %631 = vmatpush1.xpose.msra.mxu0 0.0
    %632 = vmatprep.subr.mxu0 0.0
    %633 = vmatpush1.xpose.msra.mxu0 0.0
    %634 = vmatprep.subr.mxu0 0.0
    %635 = vmatpush1.xpose.msra.mxu0 %v608
    %636 = vmatprep.subr.mxu0 0.0
    %637 = vmatpush1.xpose.msra.mxu0 %v605
    %638 = vmatprep.subr.mxu0 0.0
    %639 = vmatpush1.xpose.msra.mxu0 %v602
    %640 = vmatprep.subr.mxu0 0.0
    %641 = vmatpush1.xpose.msra.mxu0 %v599
    %642 = vmatprep.subr.mxu0 0.0
    %643 = vmatpush2.xpose.msra.mxu0 0.0
    %644 = vmatprep.subr.mxu0 0.0
    %645 = vmatpush2.xpose.msra.mxu0 0.0
    %646 = vmatprep.subr.mxu0 0.0
    %647 = vmatpush2.xpose.msra.mxu0 0.0
    %648 = vmatprep.subr.mxu0 0.0
    %649 = vmatpush2.xpose.msra.mxu0 0.0
    %650 = vmatprep.subr.mxu0 0.0
    %651 = vmatpush2.xpose.msra.mxu0 0.0
    %652 = vmatprep.subr.mxu0 0.0
    %653 = vmatpush2.xpose.msra.mxu0 0.0
    %654 = vmatprep.subr.mxu0 0.0
    %655 = vmatpush2.xpose.msra.mxu0 0.0
    %656 = vmatprep.subr.mxu0 0.0
    %657 = vmatpush2.xpose.msra.mxu0 0.0
    %658 = vmatprep.subr.mxu0 0.0
    %659 = vmatpush2.xpose.msra.mxu0 0.0
    %660 = vmatprep.subr.mxu0 0.0
    %661 = vmatpush2.xpose.msra.mxu0 0.0
    %662 = vmatprep.subr.mxu0 0.0
    %663 = vmatpush2.xpose.msra.mxu0 0.0
    %664 = vmatprep.subr.mxu0 0.0
    %665 = vmatpush2.xpose.msra.mxu0 0.0
    %666 = vmatprep.subr.mxu0 0.0
    %667 = vmatpush2.xpose.msra.mxu0 0.0
    %668 = vmatprep.subr.mxu0 0.0
    %669 = vmatpush2.xpose.msra.mxu0 0.0
    %670 = vmatprep.subr.mxu0 0.0
    %671 = vmatpush2.xpose.msra.mxu0 0.0
    %672 = vmatprep.subr.mxu0 0.0
    %673 = vmatpush2.xpose.msra.mxu0 0.0
    %674 = vmatprep.mubr.f32.mxu0 0.0
    %675 = vmatmul.mubr.f32.gmra.mxu0 %v596
    %v676 = vpop.f32.mrf.mxu0
    %v677 = vadd.f32 0.0, %v676
    %v678 = vpop.f32.mrf.mxu0
    %679 = vdwg.mxu0
    %v680 = vlaneseq
    %v681 = vshrl.u32 %v680, 7
    %v682 = vsub.s32 0, %v681
    %v683 = vrot.slane %v185, %v682
    %684 = vrot.lane.b32.xlu0 %v683, 96
    %v685 = vpop.permute.xlu0 %684
    %v686 = vsel %vm45, %v685, 0
    %688 = vmatprep.subr.mxu0 0.0
    %689 = vmatpush1.xpose.msra.mxu0 0.0
    %690 = vmatprep.subr.mxu0 0.0
    %691 = vmatpush1.xpose.msra.mxu0 0.0
    %692 = vmatprep.subr.mxu0 0.0
    %693 = vmatpush1.xpose.msra.mxu0 0.0
    %694 = vmatprep.subr.mxu0 0.0
    %695 = vmatpush1.xpose.msra.mxu0 0.0
    %696 = vmatprep.subr.mxu0 0.0
    %697 = vmatpush1.xpose.msra.mxu0 0.0
    %698 = vmatprep.subr.mxu0 0.0
    %699 = vmatpush1.xpose.msra.mxu0 0.0
    %700 = vmatprep.subr.mxu0 0.0
    %701 = vmatpush1.xpose.msra.mxu0 0.0
    %702 = vmatprep.subr.mxu0 0.0
    %703 = vmatpush1.xpose.msra.mxu0 0.0
    %704 = vmatprep.subr.mxu0 0.0
    %705 = vmatpush1.xpose.msra.mxu0 0.0
    %706 = vmatprep.subr.mxu0 0.0
    %707 = vmatpush1.xpose.msra.mxu0 0.0
    %708 = vmatprep.subr.mxu0 0.0
    %709 = vmatpush1.xpose.msra.mxu0 0.0
    %710 = vmatprep.subr.mxu0 0.0
    %711 = vmatpush1.xpose.msra.mxu0 0.0
    %712 = vmatprep.subr.mxu0 0.0
    %713 = vmatpush1.xpose.msra.mxu0 %v524
    %714 = vmatprep.subr.mxu0 0.0
    %715 = vmatpush1.xpose.msra.mxu0 %v521
    %716 = vmatprep.subr.mxu0 0.0
    %717 = vmatpush1.xpose.msra.mxu0 %v518
    %718 = vmatprep.subr.mxu0 0.0
    %719 = vmatpush1.xpose.msra.mxu0 %v515
    %720 = vmatprep.subr.mxu0 0.0
    %721 = vmatpush2.xpose.msra.mxu0 0.0
    %722 = vmatprep.subr.mxu0 0.0
    %723 = vmatpush2.xpose.msra.mxu0 0.0
    %724 = vmatprep.subr.mxu0 0.0
    %725 = vmatpush2.xpose.msra.mxu0 0.0
    %726 = vmatprep.subr.mxu0 0.0
    %727 = vmatpush2.xpose.msra.mxu0 0.0
    %728 = vmatprep.subr.mxu0 0.0
    %729 = vmatpush2.xpose.msra.mxu0 0.0
    %730 = vmatprep.subr.mxu0 0.0
    %731 = vmatpush2.xpose.msra.mxu0 0.0
    %732 = vmatprep.subr.mxu0 0.0
    %733 = vmatpush2.xpose.msra.mxu0 0.0
    %734 = vmatprep.subr.mxu0 0.0
    %735 = vmatpush2.xpose.msra.mxu0 0.0
    %736 = vmatprep.subr.mxu0 0.0
    %737 = vmatpush2.xpose.msra.mxu0 0.0
    %738 = vmatprep.subr.mxu0 0.0
    %739 = vmatpush2.xpose.msra.mxu0 0.0
    %740 = vmatprep.subr.mxu0 0.0
    %741 = vmatpush2.xpose.msra.mxu0 0.0
    %742 = vmatprep.subr.mxu0 0.0
    %743 = vmatpush2.xpose.msra.mxu0 0.0
    %744 = vmatprep.subr.mxu0 0.0
    %745 = vmatpush2.xpose.msra.mxu0 0.0
    %746 = vmatprep.subr.mxu0 0.0
    %747 = vmatpush2.xpose.msra.mxu0 0.0
    %748 = vmatprep.subr.mxu0 0.0
    %749 = vmatpush2.xpose.msra.mxu0 0.0
    %750 = vmatprep.subr.mxu0 0.0
    %751 = vmatpush2.xpose.msra.mxu0 0.0
    %752 = vmatprep.mubr.f32.mxu0 0.0
    %753 = vmatmul.mubr.f32.gmra.mxu0 %v686
    %v754 = vpop.f32.mrf.mxu0
    %v755 = vadd.f32 0.0, %v754
    %v756 = vpop.f32.mrf.mxu0
    %757 = vdwg.mxu0
    %v758 = vlaneseq
    %v759 = vshrl.u32 %v758, 7
    %v760 = vsub.s32 0, %v759
    %v761 = vrot.slane %v192, %v760
    %762 = vrot.lane.b32.xlu0 %v761, 96
    %v763 = vpop.permute.xlu0 %762
    %v764 = vsel %vm45, %v763, 0
    %766 = vmatprep.subr.mxu0 0.0
    %767 = vmatpush1.xpose.msra.mxu0 0.0
    %768 = vmatprep.subr.mxu0 0.0
    %769 = vmatpush1.xpose.msra.mxu0 0.0
    %770 = vmatprep.subr.mxu0 0.0
    %771 = vmatpush1.xpose.msra.mxu0 0.0
    %772 = vmatprep.subr.mxu0 0.0
    %773 = vmatpush1.xpose.msra.mxu0 0.0
    %774 = vmatprep.subr.mxu0 0.0
    %775 = vmatpush1.xpose.msra.mxu0 0.0
    %776 = vmatprep.subr.mxu0 0.0
    %777 = vmatpush1.xpose.msra.mxu0 0.0
    %778 = vmatprep.subr.mxu0 0.0
    %779 = vmatpush1.xpose.msra.mxu0 0.0
    %780 = vmatprep.subr.mxu0 0.0
    %781 = vmatpush1.xpose.msra.mxu0 0.0
    %782 = vmatprep.subr.mxu0 0.0
    %783 = vmatpush1.xpose.msra.mxu0 0.0
    %784 = vmatprep.subr.mxu0 0.0
    %785 = vmatpush1.xpose.msra.mxu0 0.0
    %786 = vmatprep.subr.mxu0 0.0
    %787 = vmatpush1.xpose.msra.mxu0 0.0
    %788 = vmatprep.subr.mxu0 0.0
    %789 = vmatpush1.xpose.msra.mxu0 0.0
    %790 = vmatprep.subr.mxu0 0.0
    %791 = vmatpush1.xpose.msra.mxu0 %v608
    %792 = vmatprep.subr.mxu0 0.0
    %793 = vmatpush1.xpose.msra.mxu0 %v605
    %794 = vmatprep.subr.mxu0 0.0
    %795 = vmatpush1.xpose.msra.mxu0 %v602
    %796 = vmatprep.subr.mxu0 0.0
    %797 = vmatpush1.xpose.msra.mxu0 %v599
    %798 = vmatprep.subr.mxu0 0.0
    %799 = vmatpush2.xpose.msra.mxu0 0.0
    %800 = vmatprep.subr.mxu0 0.0
    %801 = vmatpush2.xpose.msra.mxu0 0.0
    %802 = vmatprep.subr.mxu0 0.0
    %803 = vmatpush2.xpose.msra.mxu0 0.0
    %804 = vmatprep.subr.mxu0 0.0
    %805 = vmatpush2.xpose.msra.mxu0 0.0
    %806 = vmatprep.subr.mxu0 0.0
    %807 = vmatpush2.xpose.msra.mxu0 0.0
    %808 = vmatprep.subr.mxu0 0.0
    %809 = vmatpush2.xpose.msra.mxu0 0.0
    %810 = vmatprep.subr.mxu0 0.0
    %811 = vmatpush2.xpose.msra.mxu0 0.0
    %812 = vmatprep.subr.mxu0 0.0
    %813 = vmatpush2.xpose.msra.mxu0 0.0
    %814 = vmatprep.subr.mxu0 0.0
    %815 = vmatpush2.xpose.msra.mxu0 0.0
    %816 = vmatprep.subr.mxu0 0.0
    %817 = vmatpush2.xpose.msra.mxu0 0.0
    %818 = vmatprep.subr.mxu0 0.0
    %819 = vmatpush2.xpose.msra.mxu0 0.0
    %820 = vmatprep.subr.mxu0 0.0
    %821 = vmatpush2.xpose.msra.mxu0 0.0
    %822 = vmatprep.subr.mxu0 0.0
    %823 = vmatpush2.xpose.msra.mxu0 0.0
    %824 = vmatprep.subr.mxu0 0.0
    %825 = vmatpush2.xpose.msra.mxu0 0.0
    %826 = vmatprep.subr.mxu0 0.0
    %827 = vmatpush2.xpose.msra.mxu0 0.0
    %828 = vmatprep.subr.mxu0 0.0
    %829 = vmatpush2.xpose.msra.mxu0 0.0
    %830 = vmatprep.mubr.f32.mxu0 0.0
    %831 = vmatmul.mubr.f32.gmra.mxu0 %v764
    %v832 = vpop.f32.mrf.mxu0
    %v833 = vadd.f32 0.0, %v832
    %v834 = vpop.f32.mrf.mxu0
    %835 = vdwg.mxu0
    %v836 = vmul.f32 %v593, %v185
    %v837 = vmul.f32 %v677, %v192
    %v840 = vmul.f32 %v755, %v685
    %v841 = vmul.f32 %v833, %v763
    %v842 = vadd.f32 %v836, %v840
    %v843 = vadd.f32 %v837, %v841
    %vm844 = vcmask 253952
    %v845 = vsel %vm844, %v842, 0.0
    %846 = vadd.xlane.f32.xlu0 %v845
    %v847 = vpop.xlane.xlu0 %846
    %v848 = vsel %vm844, %v843, 0.0
    %849 = vadd.xlane.f32.xlu0 %v848
    %v850 = vpop.xlane.xlu0 %849
    %v851 = vand.u32 2147483647, %v847
    %v852 = vand.u32 2147483647, %v850
    %v853 = vsub.f32 0.0, %v851
    %v854 = vsub.f32 0.0, %v852
    %v855 = vmul.f32 %v853, 1.442695
    %v856 = vpow.pop %v855
    %v857 = vmul.f32 %v854, 1.442695
    %v858 = vpow.pop %v857
    %vm859 = vcmp.ge.f32.partialorder %v847, 0.0
    %vm860 = vcmp.ge.f32.partialorder %v850, 0.0
    %v861 = vadd.f32 %v856, 1.0
    %v862 = vadd.f32 %v858, 1.0
    %v863 = vrcp.pop %v861
    %v864 = vmul.f32 1.0, %v863
    %v865 = vrcp.pop %v862
    %v866 = vmul.f32 1.0, %v865
    %v867 = vmul.f32 %v856, %v863
    %v868 = vmul.f32 %v858, %v865
    %v869 = vsel %vm859, %v864, %v867
    %v870 = vsel %vm860, %v866, %v868
    %v873 = vrot.slane %v870, 7
    %v874 = vsel %vm66, %v873, %v869
    %vm876 = vcmask 523264
    %v877 = vsel %vm876, %v167, %v874
    %vm878 = vcmask 531456
    %v879 = vsel %vm878, %v877, 0.0
    %880 = vst [vmem:[#allocation7] sm:$0x3] %v879
    // Predicated region
    $region22: #{tpu_custom_call.1} parent=1 // pred_check
      _
    $region23: #{tpu_custom_call.1} parent=1 // pred_check_branch
      %882 = sbr.rel (0) target = $region25
    $region24: #{tpu_custom_call.1} parent=1 // pred_region
      %s884 = ssub.s32 32, 32
      %885 = vsyncadd [#allocation4], %s884
      %s887 = sshll.u32 [#allocation7], 4
      %s888 = int_to_ptr.vmem [resolvable:$true] %s887
      %890 = dma.vmem_to_hbm [thread:$0]  %s888, 32, %s3, [#allocation4]
    $region25: #{tpu_custom_call.1} parent=1 // pred_fallthru
      _
    // Predicated region
    $region26: #{tpu_custom_call.1} parent=1 // pred_check
      _
    $region27: #{tpu_custom_call.1} parent=1 // pred_check_branch
      %892 = sbr.rel (0) target = $region29
    $region28: #{tpu_custom_call.1} parent=1 // pred_region
      %893 = dma.done [#allocation4], 32
    $region29: #{tpu_custom_call.1} parent=1 // pred_fallthru
      _
    %894 = vsyncpa [#allocation3], 1
    %895 = vsyncpa [#allocation6], 1
    %896 = vsyncpa [#allocation4], 1

</llo_original>
